<compile_context>
chip_gen: v7x
topology: tpu7x:2x2x1
jax: 0.10.0
libtpu: 0.0.40
codegen_flags: <defaults>
</compile_context>

<pallas_src>
import functools

import jax
import jax.numpy as jnp
from jax.experimental import pallas as pl
from jax.experimental.pallas import tpu as pltpu


def _layernorm_kernel(x_ref, gamma_ref, beta_ref, o_ref, *, eps, feature_dim):
    # x_ref: (row_tile, D_pad); gamma_ref/beta_ref: (1, D_pad).
    # Zero padding along the feature dim contributes 0 to both sums, so the
    # statistics below are exact for the real `feature_dim` columns.
    x = x_ref[...].astype(jnp.float32)

    # Single-pass fused reduction: sum(x) and sum(x*x) together.
    s1 = jnp.sum(x, axis=-1, keepdims=True)          # (row_tile, 1)
    s2 = jnp.sum(x * x, axis=-1, keepdims=True)      # (row_tile, 1)

    d = jnp.float32(feature_dim)
    mean = s1 / d
    # sum((x - mean)^2) over the real columns == s2 - s1^2 / D (pads are zero).
    var = (s2 - s1 * mean) / jnp.float32(feature_dim - 1)   # unbiased (ddof=1)
    var = jnp.maximum(var, 0.0)                              # guard cancellation
    std = jnp.sqrt(var)

    # Per-row reciprocal on the (row_tile, 1) column -> cheap (EUP / tiny op),
    # leaves only one multiply per element on the VALU. approx=False keeps the
    # 1e-5 tolerance.
    inv = pl.reciprocal(std + jnp.float32(eps), approx=False)

    gamma = gamma_ref[...].astype(jnp.float32)
    beta = beta_ref[...].astype(jnp.float32)
    y = gamma * ((x - mean) * inv) + beta
    o_ref[...] = y.astype(o_ref.dtype)


def _choose_row_tile(rows, d_pad, itemsize):
    """Largest row tile that fits a conservative VMEM budget."""
    # Per row of tile: double-buffered input + output blocks in native dtype
    # plus ~one f32 working copy inside the kernel.
    budget_bytes = 24 * 1024 * 1024
    per_row = d_pad * (4 * itemsize + 4)
    t = max(8, budget_bytes // per_row)
    t = min(int(t), 1024, ((rows + 7) // 8) * 8)
    t = max(8, (t // 8) * 8)
    # Keep >= 2 grid steps when rows allow, so v7x can shard across its 2 TCs.
    if t >= rows and rows >= 16:
        t = max(8, ((rows // 2) // 8) * 8)
    return t


def layer_norm(x, gamma, beta, *, eps=1e-6, row_tile=None,
               vmem_limit_bytes=64 * 1024 * 1024):
    """LayerNorm over the last axis, matching the PyTorch module semantics."""
    orig_shape = x.shape
    d = orig_shape[-1]
    rows = 1
    for s in orig_shape[:-1]:
        rows *= int(s)
    x2 = x.reshape(rows, d)

    # Lane-dense feature dim: pad D up to a multiple of 128.
    LANE = 128
    d_pad = ((d + LANE - 1) // LANE) * LANE

    itemsize = jnp.dtype(x.dtype).itemsize
    if row_tile is None:
        row_tile = _choose_row_tile(rows, d_pad, itemsize)

    # Pad rows up to a multiple of row_tile (padded rows are sliced off later).
    n_blocks = pl.cdiv(rows, row_tile)
    rows_pad = n_blocks * row_tile

    if rows_pad != rows or d_pad != d:
        x2 = jnp.pad(x2, ((0, rows_pad - rows), (0, d_pad - d)))
    gamma2 = jnp.pad(gamma, (0, d_pad - d)).reshape(1, d_pad)
    beta2 = jnp.pad(beta, (0, d_pad - d)).reshape(1, d_pad)

    kernel = functools.partial(_layernorm_kernel, eps=eps, feature_dim=d)
    out = pl.pallas_call(
        kernel,
        out_shape=jax.ShapeDtypeStruct((rows_pad, d_pad), x.dtype),
        grid_spec=pltpu.PrefetchScalarGridSpec(
            num_scalar_prefetch=0,
            grid=(n_blocks,),
            in_specs=[
                pl.BlockSpec((row_tile, d_pad), lambda i: (i, 0)),
                pl.BlockSpec((1, d_pad), lambda i: (0, 0)),
                pl.BlockSpec((1, d_pad), lambda i: (0, 0)),
            ],
            out_specs=pl.BlockSpec((row_tile, d_pad), lambda i: (i, 0)),
        ),
        compiler_params=pltpu.CompilerParams(
            dimension_semantics=("parallel",),
            vmem_limit_bytes=vmem_limit_bytes,
        ),
    )(x2, gamma2, beta2)

    out = out[:rows, :d]
    return out.reshape(orig_shape)


if __name__ == "__main__":
    key = jax.random.PRNGKey(0)
    rows, hidden = 16, 32  # e.g. batch*seq = 16, feature_dim = 32

    x = jax.random.normal(key, (rows, hidden), dtype=jnp.float32)
    # Deterministic parameter init matching the PyTorch __init__:
    gamma = jnp.ones((hidden,), dtype=jnp.float32)
    beta = jnp.zeros((hidden,), dtype=jnp.float32)

    out = layer_norm(x, gamma, beta, eps=1e-6)
    out = jax.block_until_ready(out)

    # Reference matching the PyTorch forward (unbiased std, eps added to std).
    mean = jnp.mean(x, axis=-1, keepdims=True)
    std = jnp.sqrt(jnp.sum((x - mean) ** 2, axis=-1, keepdims=True) / (hidden - 1))
    ref = gamma * (x - mean) / (std + 1e-6) + beta
    assert jnp.allclose(out, ref, atol=1e-5, rtol=1e-5)

    print("KERNEL_OK")
</pallas_src>

<mosaic_0001>
module attributes {stable_mosaic.version = 11 : i64} {
  func.func @_layernorm_kernel(%arg0: i32, %arg1: memref<8x128xf32, #tpu.memory_space<vmem>>, %arg2: memref<1x128xf32, #tpu.memory_space<vmem>>, %arg3: memref<1x128xf32, #tpu.memory_space<vmem>>, %arg4: memref<8x128xf32, #tpu.memory_space<vmem>>) attributes {dimension_semantics = [#tpu.dimension_semantics<parallel>], iteration_bounds = array<i64: 2>, scalar_prefetch = 0 : i64, scratch_operands = 0 : i64, tpu.core_type = #tpu.core_type<tc>, window_params = [{transform_indices = @transform_0, window_bounds = array<i64: 8, 128>}, {pipeline_mode = #tpu.pipeline_mode<synchronous>, transform_indices = @transform_1, window_bounds = array<i64: 1, 128>}, {pipeline_mode = #tpu.pipeline_mode<synchronous>, transform_indices = @transform_2, window_bounds = array<i64: 1, 128>}, {transform_indices = @transform_3, window_bounds = array<i64: 8, 128>}]} {
    %c0 = arith.constant 0 : index
    %c0_0 = arith.constant 0 : index
    %0 = vector.load %arg1[%c0, %c0_0] : memref<8x128xf32, #tpu.memory_space<vmem>>, vector<8x128xf32>
    %cst = arith.constant dense<0.000000e+00> : vector<8xf32>
    %1 = vector.multi_reduction <add>, %0, %cst [1] : vector<8x128xf32> to vector<8xf32>
    %2 = vector.shape_cast %1 : vector<8xf32> to vector<8x1xf32>
    %3 = arith.mulf %0, %0 : vector<8x128xf32>
    %cst_1 = arith.constant dense<0.000000e+00> : vector<8xf32>
    %4 = vector.multi_reduction <add>, %3, %cst_1 [1] : vector<8x128xf32> to vector<8xf32>
    %5 = vector.shape_cast %4 : vector<8xf32> to vector<8x1xf32>
    %cst_2 = arith.constant 3.200000e+01 : f32
    %6 = vector.broadcast %cst_2 : f32 to vector<8x1xf32>
    %7 = arith.divf %2, %6 : vector<8x1xf32>
    %8 = arith.mulf %2, %7 : vector<8x1xf32>
    %9 = arith.subf %5, %8 : vector<8x1xf32>
    %cst_3 = arith.constant 3.100000e+01 : f32
    %10 = vector.broadcast %cst_3 : f32 to vector<8x1xf32>
    %11 = arith.divf %9, %10 : vector<8x1xf32>
    %cst_4 = arith.constant 0.000000e+00 : f32
    %12 = vector.broadcast %cst_4 : f32 to vector<8x1xf32>
    %13 = arith.maximumf %11, %12 : vector<8x1xf32>
    %14 = math.sqrt %13 : vector<8x1xf32>
    %cst_5 = arith.constant 9.99999997E-7 : f32
    %15 = vector.broadcast %cst_5 : f32 to vector<8x1xf32>
    %16 = arith.addf %14, %15 : vector<8x1xf32>
    %17 = tpu.reciprocal %16 : vector<8x1xf32> -> vector<8x1xf32>
    %c0_6 = arith.constant 0 : index
    %c0_7 = arith.constant 0 : index
    %18 = vector.load %arg2[%c0_6, %c0_7] : memref<1x128xf32, #tpu.memory_space<vmem>>, vector<1x128xf32>
    %c0_8 = arith.constant 0 : index
    %c0_9 = arith.constant 0 : index
    %19 = vector.load %arg3[%c0_8, %c0_9] : memref<1x128xf32, #tpu.memory_space<vmem>>, vector<1x128xf32>
    %20 = vector.broadcast %7 : vector<8x1xf32> to vector<8x128xf32>
    %21 = arith.subf %0, %20 : vector<8x128xf32>
    %22 = vector.broadcast %17 : vector<8x1xf32> to vector<8x128xf32>
    %23 = arith.mulf %21, %22 : vector<8x128xf32>
    %24 = vector.broadcast %18 : vector<1x128xf32> to vector<8x128xf32>
    %25 = arith.mulf %24, %23 : vector<8x128xf32>
    %26 = vector.broadcast %19 : vector<1x128xf32> to vector<8x128xf32>
    %27 = arith.addf %25, %26 : vector<8x128xf32>
    %c0_10 = arith.constant 0 : index
    %c0_11 = arith.constant 0 : index
    %28 = vector.load %arg4[%c0_10, %c0_11] : memref<8x128xf32, #tpu.memory_space<vmem>>, vector<8x128xf32>
    tpu.vector_store %arg4[%c0_10, %c0_11], %27 {strides = array<i32>} : memref<8x128xf32, #tpu.memory_space<vmem>>, vector<8x128xf32>,
    return
  }
  func.func @transform_0(%arg0: i32) -> (i32, i32) {
    %c0_i32 = arith.constant 0 : i32
    %c0_i32_0 = arith.constant 0 : i32
    return %arg0, %c0_i32 : i32, i32
  }
  func.func @transform_1(%arg0: i32) -> (i32, i32) {
    %c0_i32 = arith.constant 0 : i32
    %c0_i32_0 = arith.constant 0 : i32
    %c0_i32_1 = arith.constant 0 : i32
    return %c0_i32, %c0_i32_0 : i32, i32
  }
  func.func @transform_2(%arg0: i32) -> (i32, i32) {
    %c0_i32 = arith.constant 0 : i32
    %c0_i32_0 = arith.constant 0 : i32
    %c0_i32_1 = arith.constant 0 : i32
    return %c0_i32, %c0_i32_0 : i32, i32
  }
  func.func @transform_3(%arg0: i32) -> (i32, i32) {
    %c0_i32 = arith.constant 0 : i32
    %c0_i32_0 = arith.constant 0 : i32
    return %arg0, %c0_i32 : i32, i32
  }
}

</mosaic_0001>

<llo_original>
// kernel: tpu_custom_call.1
$region0: #{tpu_custom_call.1}
  #allocation0 [shape = 'u32[]', space=smem, size = 0x4, offset = 0x4, fixed_abs, tag = 'smem constant byte address 0x4 - core index']
  #allocation1 [shape = 'u32[144,128]{1,0:T(1,128)}', space=vmem, size = 0x12000, scoped, tag = 'internal scratch']
  %s0 = inlined_call_operand.hbm [shape: f32[16,128], index: 0, kind: input, shape index: {}]
  %s1 = inlined_call_operand.hbm [shape: f32[1,128], index: 1, kind: input, shape index: {}]
  %s2 = inlined_call_operand.hbm [shape: f32[1,128], index: 2, kind: input, shape index: {}]
  %s3 = inlined_call_operand.hbm [shape: f32[16,128], index: 3, kind: output, shape index: {}]
  %s4 = sld [smem:[#allocation0]]
  $region57: #{tpu_custom_call.1} parent=0
    _
  %s6 = ssub.s32 1, %s4
  %s7 = scalar_select 0, %s6, %s4
  $region1: #{tpu_custom_call.1} parent=0
    #allocation2 [shape = 'u8[8192]{0}', space=vmem, size = 0x2000, scoped, tag = 'input window, operand 0']
    #allocation3 [shape = 's32[2]{0}', space=sflag, size = 0x8, scoped, tag = 'scoped memory for tpu_custom_call.1']
    #allocation4 [shape = 's32[2]{0}', space=sflag, size = 0x8, scoped, tag = 'scoped memory for tpu_custom_call.1']
    #allocation5 [shape = 'u8[512]{0}', space=vmem, size = 0x400, scoped, tag = 'input window, operand 1, single buffered']
    #allocation6 [shape = 's32[1]{0}', space=sflag, size = 0x4, scoped, tag = 'scoped memory for tpu_custom_call.1']
    #allocation7 [shape = 'u8[512]{0}', space=vmem, size = 0x400, scoped, tag = 'input window, operand 2, single buffered']
    #allocation8 [shape = 'u8[8192]{0}', space=vmem, size = 0x2000, scoped, tag = 'output window, operand 0']
    %8 = vsyncpa [#allocation3], 0
    %s9 = scalar_lea.sflag [#allocation3], 1
    %10 = vsyncpa %s9, 0
    %11 = vsyncpa [#allocation6], 0
    %12 = vsyncpa [#allocation4], 0
    %s13 = scalar_lea.sflag [#allocation4], 1
    %14 = vsyncpa %s13, 0
    loop: start=0, step=1, limit=4
    $region2: #{tpu_custom_call.1} parent=1 // loop_pre_header
      _
    $region3: #{tpu_custom_call.1} parent=1 // loop_header
      %s16 = sphi 0, %s20
      %p17 = scmp.ge.s32.totalorder %s16, 4
      %s26 = sphi 0, %s28
      %s29 = sphi 0, %s26
      %s30 = sphi 0, %s29
      %s46 = sphi 0, %s30
      %s50 = sphi 0, %s50
      %s52 = sphi 0, %s50
      %s53 = sphi 0, %s52
      %s67 = sphi 0, %s53
      %s71 = sphi 0, %s71
      %s73 = sphi 0, %s71
      %s74 = sphi 0, %s73
      %s88 = sphi 0, %s74
      %s94 = sphi 0, %s96
      %s97 = sphi 0, %s94
      %s98 = sphi 0, %s97
      %s114 = sphi 0, %s98
    $region4: #{tpu_custom_call.1} parent=1 // loop_header_branch
      %19 = sbr.rel (%p17) target = $region8
    $region5: #{tpu_custom_call.1} parent=1 // loop_body
      %s21 = ssub.s32 %s16, 1
      %s22 = ssub.s32 %s16, 2
      %s23 = sadd.s32 %s16, 1
      %s24 = ssub.s32 %s16, %s23
      %p25 = scmp.eq.s32.totalorder %s24, 0
      %s27 = sadd.s32 %s26, 1
      %s28 = scalar_select %p25, %s26, %s27
      %p31 = pneg %p25
      %p32 = scmp.eq.s32.totalorder %s16, 1
      %p33 = por %p31, %p32
      %p34 = scmp.ne.s32.totalorder %s26, %s29
      %p35 = scmp.eq.s32.totalorder %s16, 0
      %p36 = por %p34, %p35
      %p37 = scmp.ne.s32.totalorder %s26, %s29
      %p38 = scmp.eq.s32.totalorder %s21, 1
      %p39 = por %p37, %p38
      %p40 = scmp.ne.s32.totalorder %s29, %s30
      %p41 = scmp.eq.s32.totalorder %s21, 0
      %p42 = por %p40, %p41
      %p43 = scmp.ne.s32.totalorder %s29, %s30
      %p44 = scmp.eq.s32.totalorder %s22, 1
      %p45 = por %p43, %p44
      %p47 = scmp.ne.s32.totalorder %s30, %s46
      %p48 = scmp.eq.s32.totalorder %s22, 0
      %p49 = por %p47, %p48
      %s51 = sadd.s32 %s50, 1
      %p54 = scmp.eq.s32.totalorder %s16, 1
      %p55 = scmp.ne.s32.totalorder %s50, %s52
      %p56 = scmp.eq.s32.totalorder %s16, 0
      %p57 = por %p55, %p56
      %p58 = scmp.ne.s32.totalorder %s50, %s52
      %p59 = scmp.eq.s32.totalorder %s21, 1
      %p60 = por %p58, %p59
      %p61 = scmp.ne.s32.totalorder %s52, %s53
      %p62 = scmp.eq.s32.totalorder %s21, 0
      %p63 = por %p61, %p62
      %p64 = scmp.ne.s32.totalorder %s52, %s53
      %p65 = scmp.eq.s32.totalorder %s22, 1
      %p66 = por %p64, %p65
      %p68 = scmp.ne.s32.totalorder %s53, %s67
      %p69 = scmp.eq.s32.totalorder %s22, 0
      %p70 = por %p68, %p69
      %s72 = sadd.s32 %s71, 1
      %p75 = scmp.eq.s32.totalorder %s16, 1
      %p76 = scmp.ne.s32.totalorder %s71, %s73
      %p77 = scmp.eq.s32.totalorder %s16, 0
      %p78 = por %p76, %p77
      %p79 = scmp.ne.s32.totalorder %s71, %s73
      %p80 = scmp.eq.s32.totalorder %s21, 1
      %p81 = por %p79, %p80
      %p82 = scmp.ne.s32.totalorder %s73, %s74
      %p83 = scmp.eq.s32.totalorder %s21, 0
      %p84 = por %p82, %p83
      %p85 = scmp.ne.s32.totalorder %s73, %s74
      %p86 = scmp.eq.s32.totalorder %s22, 1
      %p87 = por %p85, %p86
      %p89 = scmp.ne.s32.totalorder %s74, %s88
      %p90 = scmp.eq.s32.totalorder %s22, 0
      %p91 = por %p89, %p90
      %s92 = ssub.s32 %s16, %s23
      %p93 = scmp.eq.s32.totalorder %s92, 0
      %s95 = sadd.s32 %s94, 1
      %s96 = scalar_select %p93, %s94, %s95
      %p99 = pneg %p93
      %p100 = scmp.eq.s32.totalorder %s16, 1
      %p101 = por %p99, %p100
      %p102 = scmp.ne.s32.totalorder %s94, %s97
      %p103 = scmp.eq.s32.totalorder %s16, 0
      %p104 = por %p102, %p103
      %p105 = scmp.ne.s32.totalorder %s94, %s97
      %p106 = scmp.eq.s32.totalorder %s21, 1
      %p107 = por %p105, %p106
      %p108 = scmp.ne.s32.totalorder %s97, %s98
      %p109 = scmp.eq.s32.totalorder %s21, 0
      %p110 = por %p108, %p109
      %p111 = scmp.ne.s32.totalorder %s97, %s98
      %p112 = scmp.eq.s32.totalorder %s22, 1
      %p113 = por %p111, %p112
      %p115 = scmp.ne.s32.totalorder %s98, %s114
      %p116 = scmp.eq.s32.totalorder %s22, 0
      %p117 = por %p115, %p116
      %p118 = scmp.le.s32.totalorder 1, %s16
      %p119 = scmp.lt.s32.totalorder %s16, 3
      %p120 = pnand %p118, %p119
      %p121 = pneg %p120
      // Predicated region
      $region9: #{tpu_custom_call.1} parent=5 // pred_check
        _
      $region10: #{tpu_custom_call.1} parent=5 // pred_check_branch
        %123 = sbr.rel (%p120) target = $region12
      $region11: #{tpu_custom_call.1} parent=5 // pred_region
        %s124 = ssub.s32 %s16, 1
        // Predicated region
        $region13: #{tpu_custom_call.1} parent=11 // pred_check
          %p125 = pneg %p63
        $region14: #{tpu_custom_call.1} parent=11 // pred_check_branch
          %127 = sbr.rel (%p125) target = $region16
        $region15: #{tpu_custom_call.1} parent=11 // pred_region
          %s129 = ssub.s32 16, 16
          %130 = vsyncadd [#allocation6], %s129
          %s132 = sshll.u32 [#allocation5], 4
          %s133 = int_to_ptr.vmem [resolvable:$true] %s132
          %135 = dma.hbm_to_vmem [thread:$0]  %s1, 16, %s133, [#allocation6]
        $region16: #{tpu_custom_call.1} parent=11 // pred_fallthru
          _
        // Predicated region
        $region17: #{tpu_custom_call.1} parent=11 // pred_check
          %p136 = pneg %p84
        $region18: #{tpu_custom_call.1} parent=11 // pred_check_branch
          %138 = sbr.rel (%p136) target = $region20
        $region19: #{tpu_custom_call.1} parent=11 // pred_region
          %s140 = ssub.s32 16, 16
          %141 = vsyncadd [#allocation6], %s140
          %s143 = sshll.u32 [#allocation7], 4
          %s144 = int_to_ptr.vmem [resolvable:$true] %s143
          %146 = dma.hbm_to_vmem [thread:$0]  %s2, 16, %s144, [#allocation6]
        $region20: #{tpu_custom_call.1} parent=11 // pred_fallthru
          _
      $region12: #{tpu_custom_call.1} parent=5 // pred_fallthru
        _
      %p147 = scmp.lt.s32.totalorder %s16, 2
      // Predicated region
      $region21: #{tpu_custom_call.1} parent=5 // pred_check
        %p148 = pneg %p147
      $region22: #{tpu_custom_call.1} parent=5 // pred_check_branch
        %150 = sbr.rel (%p148) target = $region24
      $region23: #{tpu_custom_call.1} parent=5 // pred_region
        // Predicated region
        $region25: #{tpu_custom_call.1} parent=23 // pred_check
          %p151 = pneg %p36
        $region26: #{tpu_custom_call.1} parent=23 // pred_check_branch
          %153 = sbr.rel (%p151) target = $region28
        $region27: #{tpu_custom_call.1} parent=23 // pred_region
          %s154 = sand.u32 %s26, 1
          %s155 = scalar_lea.sflag [#allocation3], %s154
          %s156 = sand.u32 %s26, 1
          %s157 = smul.addr %s156, 8
          %s158 = scalar_lea.vmem [#allocation2], %s157
          %s160 = ssub.s32 128, 128
          %161 = vsyncadd %s155, %s160
          %s162 = smul.addr %s16, 128
          %s163 = scalar_lea.hbm %s0, %s162
          %s165 = sshll.u32 %s158, 4
          %s166 = int_to_ptr.vmem [resolvable:$true] %s165
          %168 = dma.hbm_to_vmem [thread:$0]  %s163, 128, %s166, %s155
        $region28: #{tpu_custom_call.1} parent=23 // pred_fallthru
          _
      $region24: #{tpu_custom_call.1} parent=5 // pred_fallthru
        _
      %p169 = scmp.le.s32.totalorder 1, %s16
      %p170 = scmp.lt.s32.totalorder %s16, 3
      %p171 = pnand %p169, %p170
      %p172 = pneg %p171
      // Predicated region
      $region29: #{tpu_custom_call.1} parent=5 // pred_check
        _
      $region30: #{tpu_custom_call.1} parent=5 // pred_check_branch
        %174 = sbr.rel (%p171) target = $region32
      $region31: #{tpu_custom_call.1} parent=5 // pred_region
        %s175 = ssub.s32 %s16, 1
        %s176 = sand.u32 %s29, 1
        %s177 = scalar_lea.sflag [#allocation3], %s176
        %s178 = sand.u32 %s29, 1
        %s179 = smul.addr %s178, 8
        %s180 = scalar_lea.vmem [#allocation2], %s179
        // Predicated region
        $region33: #{tpu_custom_call.1} parent=31 // pred_check
          %p181 = pneg %p42
        $region34: #{tpu_custom_call.1} parent=31 // pred_check_branch
          %183 = sbr.rel (%p181) target = $region36
        $region35: #{tpu_custom_call.1} parent=31 // pred_region
          %184 = dma.done %s177, 128
        $region36: #{tpu_custom_call.1} parent=31 // pred_fallthru
          _
        // Predicated region
        $region37: #{tpu_custom_call.1} parent=31 // pred_check
          %p185 = pneg %p63
        $region38: #{tpu_custom_call.1} parent=31 // pred_check_branch
          %187 = sbr.rel (%p185) target = $region40
        $region39: #{tpu_custom_call.1} parent=31 // pred_region
          %188 = dma.done [#allocation6], 16
        $region40: #{tpu_custom_call.1} parent=31 // pred_fallthru
          _
        // Predicated region
        $region41: #{tpu_custom_call.1} parent=31 // pred_check
          %p189 = pneg %p84
        $region42: #{tpu_custom_call.1} parent=31 // pred_check_branch
          %191 = sbr.rel (%p189) target = $region44
        $region43: #{tpu_custom_call.1} parent=31 // pred_region
          %192 = dma.done [#allocation6], 16
        $region44: #{tpu_custom_call.1} parent=31 // pred_fallthru
          _
        %s193 = sand.u32 %s29, 1
        %s194 = scalar_lea.sflag [#allocation3], %s193
        %s195 = sand.u32 %s29, 1
        %s196 = smul.addr %s195, 8
        %s197 = scalar_lea.vmem [#allocation2], %s196
        %p198 = pneg %p42
        %p199 = pneg %p39
        %p200 = pneg %p63
        %p201 = pneg %p60
        %p202 = pneg %p84
        %p203 = pneg %p81
        %p204 = pneg %p110
        %p205 = pneg %p107
        %s206 = sand.u32 %s97, 1
        %s207 = scalar_lea.sflag [#allocation4], %s206
        %s208 = sand.u32 %s97, 1
        %s209 = smul.addr %s208, 8
        %s210 = scalar_lea.vmem [#allocation8], %s209
        %v211 = vld [vmem:[%s180] sm:$0xff]
        %212 = vadd.xlane.f32.xlu0 %v211
        %v213 = vpop.xlane.xlu0 %212
        %v214 = vmul.f32 %v211, %v211
        %215 = vadd.xlane.f32.xlu0 %v214
        %v216 = vpop.xlane.xlu0 %215
        %v217 = vrcp.pop 32.0
        %v218 = vmul.f32 %v213, %v217
        %v219 = vmul.f32 %v213, %v218
        %v220 = vsub.f32 %v216, %v219
        %v221 = vrcp.pop 31.0
        %v222 = vmul.f32 %v220, %v221
        %v223 = vmax.f32 %v222, 0.0
        %v224 = vrsqrt.pop %v223
        %v225 = vmul.f32 %v223, %v224
        %vm226 = vcmp.eq.f32.partialorder %v223, inf
        %v227 = vsel %vm226, %v223, %v225
        %vm228 = vcmp.eq.f32.partialorder %v223, 0.0
        %v229 = vand.u32 %v223, 2147483648
        %v230 = vsel %vm228, %v229, %v227
        %v231 = vadd.f32 %v230, 1e-06
        %v232 = vrcp.pop %v231
        %v233 = vld [vmem:[#allocation5] sm:$0x1]
        %v234 = vld [vmem:[#allocation7] sm:$0x1]
        %v235 = vsub.f32 %v211, %v218
        %v236 = vmul.f32 %v235, %v232
        %v238 = vlaneseq
        %v239 = vshrl.u32 %v238, 7
        %v240 = vsub.s32 0, %v239
        %v241 = vrot.slane %v233, %v240
        %v243 = vmul.f32 %v241, %v236
        %v245 = vlaneseq
        %v246 = vshrl.u32 %v245, 7
        %v247 = vsub.s32 0, %v246
        %v248 = vrot.slane %v234, %v247
        %v250 = vadd.f32 %v243, %v248
        %251 = vst [vmem:[%s210] sm:$0xff] %v250
        %s252 = sand.u32 %s97, 1
        %s253 = scalar_lea.sflag [#allocation4], %s252
        %s254 = sand.u32 %s97, 1
        %s255 = smul.addr %s254, 8
        %s256 = scalar_lea.vmem [#allocation8], %s255
        // Predicated region
        $region45: #{tpu_custom_call.1} parent=31 // pred_check
          %p257 = pneg %p107
        $region46: #{tpu_custom_call.1} parent=31 // pred_check_branch
          %259 = sbr.rel (%p257) target = $region48
        $region47: #{tpu_custom_call.1} parent=31 // pred_region
          %s261 = ssub.s32 128, 128
          %262 = vsyncadd %s253, %s261
          %s263 = smul.addr %s21, 128
          %s264 = scalar_lea.hbm %s3, %s263
          %s266 = sshll.u32 %s256, 4
          %s267 = int_to_ptr.vmem [resolvable:$true] %s266
          %269 = dma.vmem_to_hbm [thread:$0]  %s267, 128, %s264, %s253
        $region48: #{tpu_custom_call.1} parent=31 // pred_fallthru
          _
      $region32: #{tpu_custom_call.1} parent=5 // pred_fallthru
        _
      %p270 = scmp.le.s32.totalorder 2, %s16
      // Predicated region
      $region49: #{tpu_custom_call.1} parent=5 // pred_check
        %p271 = pneg %p270
      $region50: #{tpu_custom_call.1} parent=5 // pred_check_branch
        %273 = sbr.rel (%p271) target = $region52
      $region51: #{tpu_custom_call.1} parent=5 // pred_region
        %s274 = ssub.s32 %s16, 2
        // Predicated region
        $region53: #{tpu_custom_call.1} parent=51 // pred_check
          %p275 = pneg %p113
        $region54: #{tpu_custom_call.1} parent=51 // pred_check_branch
          %277 = sbr.rel (%p275) target = $region56
        $region55: #{tpu_custom_call.1} parent=51 // pred_region
          %s278 = sand.u32 %s98, 1
          %s279 = scalar_lea.sflag [#allocation4], %s278
          %s280 = sand.u32 %s98, 1
          %s281 = smul.addr %s280, 8
          %s282 = scalar_lea.vmem [#allocation8], %s281
          %283 = dma.done %s279, 128
        $region56: #{tpu_custom_call.1} parent=51 // pred_fallthru
          _
      $region52: #{tpu_custom_call.1} parent=5 // pred_fallthru
        _
    $region6: #{tpu_custom_call.1} parent=1 // loop_footer
      %s20 = sadd.s32 1, %s16
    $region7: #{tpu_custom_call.1} parent=1 // loop_footer_branch
      %15 = sbr.rel target = $region3
    $region8: #{tpu_custom_call.1} parent=1 // loop_exit
      _
    %284 = vsyncpa [#allocation3], 1
    %s285 = scalar_lea.sflag [#allocation3], 1
    %286 = vsyncpa %s285, 1
    %287 = vsyncpa [#allocation6], 1
    %288 = vsyncpa [#allocation4], 1
    %s289 = scalar_lea.sflag [#allocation4], 1
    %290 = vsyncpa %s289, 1

</llo_original>
